<compile_context>
chip_gen: v7x
topology: tpu7x:2x2x1
jax: 0.10.0
libtpu: 0.0.40
codegen_flags: <defaults>
</compile_context>

<pallas_src>
import functools
import math

import jax
import jax.numpy as jnp
from jax import lax
from jax.experimental import pallas as pl
from jax.experimental.pallas import tpu as pltpu

EPS = float(jnp.finfo(jnp.float32).eps)  # matches torch.finfo(torch.float32).eps

LANE = 128                              # lane width
ACC_ROWS = 8                            # vreg-shaped accumulator (8, 128)
NUM_CORES = 2                           # leading "parallel" grid axis (v7x megacore)
TARGET_TILE_BYTES = 4 * 1024 * 1024     # ~4 MiB per input per grid step
VMEM_LIMIT_BYTES = 40 * 1024 * 1024     # explicit scoped-VMEM limit (fits all gens)


def _logmse_sum_kernel(yt_ref, yp_ref, out_ref, acc_ref, *, eps, valid_rows,
                       tile_rows, total_tiles, steps_per_core, block_off):
    """Per-core partial sum of (log(yt+eps) - log(yp+eps))^2 over row blocks.

    Grid = (NUM_CORES, steps_per_core).  Core c processes global row-blocks
    [block_off*c, block_off*c + steps_per_core); when total_tiles is odd the
    two ranges overlap by one block, which core 1 skips (ownership gate), so
    every block is counted exactly once and no block index is out of bounds.
    """
    c = pl.program_id(0)
    i = pl.program_id(1)

    @pl.when(i == 0)
    def _init():
        acc_ref[...] = jnp.zeros_like(acc_ref)

    def accumulate(masked):
        yt = yt_ref[...].astype(jnp.float32)
        yp = yp_ref[...].astype(jnp.float32)
        if masked:
            # Only emitted (and executed) on the single ragged last block:
            # rows past the logical end become 1.0 on BOTH sides before the
            # log, so they contribute exactly 0 (no NaN/Inf leakage).
            row = (lax.broadcasted_iota(jnp.int32, (tile_rows, LANE), 0)
                   + (total_tiles - 1) * tile_rows)
            in_bounds = row < valid_rows
            yt = jnp.where(in_bounds, yt, 1.0)
            yp = jnp.where(in_bounds, yp, 1.0)
        d = jnp.log(yt + eps) - jnp.log(yp + eps)
        dsq = d * d
        if tile_rows % ACC_ROWS == 0:
            # Pure VPU adds into the resident vreg-shaped accumulator; the
            # reshape only splits the leading (sublane) dim -> layout no-op.
            acc_ref[...] += jnp.sum(
                dsq.reshape(tile_rows // ACC_ROWS, ACC_ROWS, LANE), axis=0)
        else:
            # Rare: one small block whose row count isn't a multiple of 8.
            acc_ref[0:1, :] += jnp.sum(dsq, axis=0, keepdims=True)

    g = c * block_off + i                                  # global block index
    ragged = (valid_rows % tile_rows) != 0                 # Python bool
    overlap = NUM_CORES * steps_per_core - total_tiles     # Python int (0 or 1)
    owned = (g >= c * steps_per_core) if overlap else None

    if (not ragged) and (not overlap):
        accumulate(False)                                  # unguarded steady state
    elif ragged:
        is_last = g == (total_tiles - 1)
        not_last = jnp.logical_not(is_last)
        if owned is not None:
            is_last = jnp.logical_and(owned, is_last)
            not_last = jnp.logical_and(owned, not_last)
        pl.when(not_last)(lambda: accumulate(False))
        pl.when(is_last)(lambda: accumulate(True))
    else:
        pl.when(owned)(lambda: accumulate(False))

    @pl.when(i == steps_per_core - 1)
    def _finalize():
        # One cross-sublane/lane reduce per core, once per kernel.
        out_ref[0] = jnp.sum(acc_ref[...], keepdims=True)


def logmse_pallas(y_true, y_pred, *, ds_size, batch_size, ds_scale=True, eps=EPS):
    """Pallas implementation of LogMSE.forward (+ Criterion.scale_ds)."""
    assert y_true.shape == y_pred.shape
    n = int(math.prod(y_true.shape))
    assert n > 0

    yt = jnp.reshape(y_true, (-1,))
    yp = jnp.reshape(y_pred, (-1,))

    rows = n // LANE
    n_main = rows * LANE
    tail = n - n_main
    itemsize = jnp.dtype(y_true.dtype).itemsize

    total = jnp.float32(0.0)

    if rows > 0:
        if tail:
            # TODO(synk): prefix slice copies the inputs once when n % 128 != 0.
            yt_m = lax.slice(yt, (0,), (n_main,))
            yp_m = lax.slice(yp, (0,), (n_main,))
        else:
            yt_m, yp_m = yt, yp            # zero-copy (bitcast reshape below)
        yt_m = yt_m.reshape(rows, LANE)
        yp_m = yp_m.reshape(rows, LANE)

        # dtype-aware tile height: ~4 MiB per input per step
        # (f32 -> 8192 rows, bf16 -> 16384 rows), clamped to the array.
        tile_rows = min(rows, max(ACC_ROWS, TARGET_TILE_BYTES // (LANE * itemsize)))
        total_tiles = -(-rows // tile_rows)
        steps_per_core = -(-total_tiles // NUM_CORES)
        block_off = total_tiles - steps_per_core   # core 1's starting block

        kernel = functools.partial(
            _logmse_sum_kernel,
            eps=float(eps),                 # Python scalars -> jaxpr literals
            valid_rows=int(rows),
            tile_rows=int(tile_rows),
            total_tiles=int(total_tiles),
            steps_per_core=int(steps_per_core),
            block_off=int(block_off),
        )

        in_map = lambda c, i: (c * block_off + i, 0)

        partials = pl.pallas_call(
            kernel,
            out_shape=jax.ShapeDtypeStruct((NUM_CORES, 1, 1), jnp.float32),
            grid_spec=pltpu.PrefetchScalarGridSpec(
                num_scalar_prefetch=0,
                grid=(NUM_CORES, steps_per_core),
                in_specs=[
                    pl.BlockSpec((tile_rows, LANE), in_map),   # y_true tile
                    pl.BlockSpec((tile_rows, LANE), in_map),   # y_pred tile
                ],
                out_specs=pl.BlockSpec((1, 1, 1), lambda c, i: (c, 0, 0)),
                scratch_shapes=[pltpu.VMEM((ACC_ROWS, LANE), jnp.float32)],
            ),
            compiler_params=pltpu.CompilerParams(
                dimension_semantics=("parallel", "arbitrary"),
                vmem_limit_bytes=VMEM_LIMIT_BYTES,
            ),
            cost_estimate=pl.CostEstimate(
                flops=7 * n_main,
                transcendentals=2 * n_main,
                bytes_accessed=2 * n_main * itemsize + NUM_CORES * 4,
            ),
        )(yt_m, yp_m)
        total = jnp.sum(partials)

    if tail:
        # <128-element lane tail: trivial host-side expression added to the sum.
        yt_t = lax.slice(yt, (n_main,), (n,)).astype(jnp.float32)
        yp_t = lax.slice(yp, (n_main,), (n,)).astype(jnp.float32)
        total = total + jnp.sum(
            jnp.square(jnp.log(yt_t + float(eps)) - jnp.log(yp_t + float(eps))))

    # mean + dataset-size scaling applied to the summed scalar in the wrapper.
    loss = total / jnp.float32(n)
    if ds_scale:
        loss = loss * jnp.sqrt(jnp.float32(ds_size) / jnp.float32(batch_size))
    return loss


def logmse_reference(y_true, y_pred, *, ds_size, batch_size, ds_scale=True, eps=EPS):
    yt = jnp.log(y_true.astype(jnp.float32) + eps)
    yp = jnp.log(y_pred.astype(jnp.float32) + eps)
    loss = jnp.mean(jnp.square(yt - yp))
    if ds_scale:
        loss = loss * jnp.sqrt(jnp.float32(ds_size) / jnp.float32(batch_size))
    return loss


if __name__ == "__main__":
    key = jax.random.PRNGKey(0)
    k1, k2 = jax.random.split(key)

    # small shape consistent with the forward (neural responses, NCHW-ish)
    shape = (2, 4, 16, 16)  # [B, C, H, W]
    # responses are non-negative (log expects >= 0 input + eps)
    y_true = jax.random.uniform(k1, shape, dtype=jnp.float32, minval=0.0, maxval=5.0)
    y_pred = jax.random.uniform(k2, shape, dtype=jnp.float32, minval=0.0, maxval=5.0)

    # deterministic "dataset size" (as in Criterion.ds_sizes) and batch size
    ds_size = 1000.0
    batch_size = shape[0]

    loss = logmse_pallas(y_true, y_pred, ds_size=ds_size, batch_size=batch_size,
                         ds_scale=True)
    loss = jax.block_until_ready(loss)

    ref = logmse_reference(y_true, y_pred, ds_size=ds_size, batch_size=batch_size,
                           ds_scale=True)
    assert jnp.allclose(loss, ref, rtol=1e-5, atol=1e-6), (loss, ref)

    print("KERNEL_OK")
</pallas_src>

<mosaic_0001>
module attributes {stable_mosaic.version = 11 : i64} {
  func.func @_logmse_sum_kernel(%arg0: i32, %arg1: i32, %arg2: memref<16x128xf32, #tpu.memory_space<vmem>>, %arg3: memref<16x128xf32, #tpu.memory_space<vmem>>, %arg4: memref<1x1x1xf32, #tpu.memory_space<vmem>>, %arg5: memref<8x128xf32, #tpu.memory_space<vmem>>) attributes {dimension_semantics = [#tpu.dimension_semantics<parallel>, #tpu.dimension_semantics<arbitrary>], iteration_bounds = array<i64: 2, 1>, scalar_prefetch = 0 : i64, scratch_operands = 1 : i64, tpu.core_type = #tpu.core_type<tc>, window_params = [{transform_indices = @transform_0, window_bounds = array<i64: 16, 128>}, {transform_indices = @transform_1, window_bounds = array<i64: 16, 128>}, {transform_indices = @transform_2, window_bounds = array<i64: 1, 1, 1>}]} {
    %c0_i32 = arith.constant 0 : i32
    %0 = arith.cmpi eq, %arg1, %c0_i32 : i32
    %1 = arith.extui %0 : i1 to i32
    %c0_i32_0 = arith.constant 0 : i32
    %2 = arith.cmpi ne, %1, %c0_i32_0 : i32
    scf.if %2 {
      %cst = arith.constant 0.000000e+00 : f32
      %12 = vector.broadcast %cst : f32 to vector<8x128xf32>
      %c0 = arith.constant 0 : index
      %c0_5 = arith.constant 0 : index
      %13 = vector.load %arg5[%c0, %c0_5] : memref<8x128xf32, #tpu.memory_space<vmem>>, vector<8x128xf32>
      tpu.vector_store %arg5[%c0, %c0_5], %12 {strides = array<i32>} : memref<8x128xf32, #tpu.memory_space<vmem>>, vector<8x128xf32>,
    } else {
    }
    %c0_i32_1 = arith.constant 0 : i32
    %3 = arith.muli %arg0, %c0_i32_1 : i32
    %4 = arith.addi %3, %arg1 : i32
    %c1_i32 = arith.constant 1 : i32
    %5 = arith.muli %arg0, %c1_i32 : i32
    %6 = arith.cmpi sge, %4, %5 : i32
    %7 = arith.extui %6 : i1 to i32
    %c0_i32_2 = arith.constant 0 : i32
    %8 = arith.cmpi ne, %7, %c0_i32_2 : i32
    scf.if %8 {
      %c0 = arith.constant 0 : index
      %c0_5 = arith.constant 0 : index
      %12 = vector.load %arg2[%c0, %c0_5] : memref<16x128xf32, #tpu.memory_space<vmem>>, vector<16x128xf32>
      %c0_6 = arith.constant 0 : index
      %c0_7 = arith.constant 0 : index
      %13 = vector.load %arg3[%c0_6, %c0_7] : memref<16x128xf32, #tpu.memory_space<vmem>>, vector<16x128xf32>
      %cst = arith.constant 1.1920929E-7 : f32
      %14 = vector.broadcast %cst : f32 to vector<16x128xf32>
      %15 = arith.addf %12, %14 : vector<16x128xf32>
      %16 = math.log %15 : vector<16x128xf32>
      %cst_8 = arith.constant 1.1920929E-7 : f32
      %17 = vector.broadcast %cst_8 : f32 to vector<16x128xf32>
      %18 = arith.addf %13, %17 : vector<16x128xf32>
      %19 = math.log %18 : vector<16x128xf32>
      %20 = arith.subf %16, %19 : vector<16x128xf32>
      %21 = arith.mulf %20, %20 : vector<16x128xf32>
      %c0_9 = arith.constant 0 : index
      %c0_10 = arith.constant 0 : index
      %22 = vector.load %arg5[%c0_9, %c0_10] : memref<8x128xf32, #tpu.memory_space<vmem>>, vector<8x128xf32>
      %23 = vector.shape_cast %21 : vector<16x128xf32> to vector<2x8x128xf32>
      %cst_11 = arith.constant dense<0.000000e+00> : vector<8x128xf32>
      %24 = vector.multi_reduction <add>, %23, %cst_11 [0] : vector<2x8x128xf32> to vector<8x128xf32>
      %25 = arith.addf %22, %24 : vector<8x128xf32>
      %c0_12 = arith.constant 0 : index
      %c0_13 = arith.constant 0 : index
      %26 = vector.load %arg5[%c0_12, %c0_13] : memref<8x128xf32, #tpu.memory_space<vmem>>, vector<8x128xf32>
      tpu.vector_store %arg5[%c0_12, %c0_13], %25 {strides = array<i32>} : memref<8x128xf32, #tpu.memory_space<vmem>>, vector<8x128xf32>,
    } else {
    }
    %c0_i32_3 = arith.constant 0 : i32
    %9 = arith.cmpi eq, %arg1, %c0_i32_3 : i32
    %10 = arith.extui %9 : i1 to i32
    %c0_i32_4 = arith.constant 0 : i32
    %11 = arith.cmpi ne, %10, %c0_i32_4 : i32
    scf.if %11 {
      %c0 = arith.constant 0 : index
      %c0_5 = arith.constant 0 : index
      %12 = vector.load %arg5[%c0, %c0_5] : memref<8x128xf32, #tpu.memory_space<vmem>>, vector<8x128xf32>
      %13 = vector.shape_cast %12 : vector<8x128xf32> to vector<1x8x128xf32>
      %cst = arith.constant dense<0.000000e+00> : vector<1xf32>
      %14 = vector.multi_reduction <add>, %13, %cst [1, 2] : vector<1x8x128xf32> to vector<1xf32>
      %15 = vector.shape_cast %14 : vector<1xf32> to vector<1x1x1xf32>
      %16 = vector.extract %15[0, 0, 0] : f32 from vector<1x1x1xf32>
      %17 = vector.broadcast %16 : f32 to vector<1x1xf32>
      %c0_6 = arith.constant 0 : index
      %c0_7 = arith.constant 0 : index
      %c0_8 = arith.constant 0 : index
      %18 = vector.load %arg4[%c0_6, %c0_7, %c0_8] : memref<1x1x1xf32, #tpu.memory_space<vmem>>, vector<1x1x1xf32>
      %19 = vector.shape_cast %18 : vector<1x1x1xf32> to vector<1x1xf32>
      %20 = vector.shape_cast %17 : vector<1x1xf32> to vector<1x1x1xf32>
      tpu.vector_store %arg4[%c0_6, %c0_7, %c0_8], %20 {strides = array<i32>} : memref<1x1x1xf32, #tpu.memory_space<vmem>>, vector<1x1x1xf32>,
    } else {
    }
    return
  }
  func.func @transform_0(%arg0: i32, %arg1: i32) -> (i32, i32) {
    %c0_i32 = arith.constant 0 : i32
    %0 = arith.muli %arg0, %c0_i32 : i32
    %1 = arith.addi %0, %arg1 : i32
    %c0_i32_0 = arith.constant 0 : i32
    %c0_i32_1 = arith.constant 0 : i32
    return %1, %c0_i32_0 : i32, i32
  }
  func.func @transform_1(%arg0: i32, %arg1: i32) -> (i32, i32) {
    %c0_i32 = arith.constant 0 : i32
    %0 = arith.muli %arg0, %c0_i32 : i32
    %1 = arith.addi %0, %arg1 : i32
    %c0_i32_0 = arith.constant 0 : i32
    %c0_i32_1 = arith.constant 0 : i32
    return %1, %c0_i32_0 : i32, i32
  }
  func.func @transform_2(%arg0: i32, %arg1: i32) -> (i32, i32, i32) {
    %c0_i32 = arith.constant 0 : i32
    %c0_i32_0 = arith.constant 0 : i32
    %c0_i32_1 = arith.constant 0 : i32
    return %arg0, %c0_i32, %c0_i32_0 : i32, i32, i32
  }
}

</mosaic_0001>

<llo_original>
// kernel: tpu_custom_call.1
$region0: #{tpu_custom_call.1}
  #allocation0 [shape = 'u32[]', space=smem, size = 0x4, offset = 0x4, fixed_abs, tag = 'smem constant byte address 0x4 - core index']
  #allocation1 [shape = 'u32[144,128]{1,0:T(1,128)}', space=vmem, size = 0x12000, scoped, tag = 'internal scratch']
  #allocation2 [shape = 'f32[8,128]{1,0:T(8,128)}', space=vmem, size = 0x1000, scoped, tag = 'scratch operand']
  %s0 = inlined_call_operand.hbm [shape: f32[16,128], index: 0, kind: input, shape index: {}]
  %s1 = inlined_call_operand.hbm [shape: f32[16,128], index: 1, kind: input, shape index: {}]
  %s2 = inlined_call_operand.vmem [shape: f32[2,1,1], index: 2, kind: output, shape index: {}]
  %s3 = sld [smem:[#allocation0]]
  $region61: #{tpu_custom_call.1} parent=0
    _
  %s5 = ssub.s32 1, %s3
  %s6 = scalar_select 0, %s5, %s3
  $region1: #{tpu_custom_call.1} parent=0
    #allocation3 [shape = 'u8[8192]{0}', space=vmem, size = 0x2000, scoped, tag = 'input window, operand 0, single buffered']
    #allocation4 [shape = 's32[2]{0}', space=sflag, size = 0x8, scoped, tag = 'scoped memory for tpu_custom_call.1']
    #allocation5 [shape = 'u8[8192]{0}', space=vmem, size = 0x2000, scoped, tag = 'input window, operand 1, single buffered']
    #allocation6 [shape = 's32[1]{0}', space=sflag, size = 0x4, scoped, tag = 'scoped memory for tpu_custom_call.1']
    %7 = vsyncpa [#allocation4], 0
    %8 = vsyncpa [#allocation6], 0
    loop: start=0, step=1, limit=4
    $region2: #{tpu_custom_call.1} parent=1 // loop_pre_header
      _
    $region3: #{tpu_custom_call.1} parent=1 // loop_header
      %s10 = sphi 0, %s14
      %p11 = scmp.ge.s32.totalorder %s10, 4
      %s17 = sphi 0, %s29
      %s18 = sphi 0, %s25
      %s19 = sphi 0, %s17
      %s20 = sphi 0, %s18
      %s21 = sphi 0, %s19
      %s22 = sphi 0, %s20
      %s32 = sphi 0, %s34
      %s35 = sphi 0, %s32
      %s36 = sphi 0, %s35
      %s52 = sphi 0, %s36
      %s58 = sphi 0, %s60
      %s61 = sphi 0, %s58
      %s62 = sphi 0, %s61
      %s78 = sphi 0, %s62
      %s84 = sphi 0, %s86
      %s87 = sphi 0, %s84
      %s88 = sphi 0, %s87
      %s104 = sphi 0, %s88
    $region4: #{tpu_custom_call.1} parent=1 // loop_header_branch
      %13 = sbr.rel (%p11) target = $region8
    $region5: #{tpu_custom_call.1} parent=1 // loop_body
      %s15 = ssub.s32 %s10, 1
      %s16 = ssub.s32 %s10, 2
      %s23 = sadd.s32 1, %s18
      %p24 = scmp.ge.s32.totalorder %s23, 1
      %s25 = scalar_select %p24, 0, %s23
      %s26 = sadd.s32 1, %s17
      %s27 = scalar_select %p24, %s26, %s17
      %p28 = scmp.ge.s32.totalorder %s27, 2
      %s29 = scalar_select %p28, 0, %s27
      %s30 = ssub.s32 %s18, %s25
      %p31 = scmp.eq.s32.totalorder %s30, 0
      %s33 = sadd.s32 %s32, 1
      %s34 = scalar_select %p31, %s32, %s33
      %p37 = pneg %p31
      %p38 = scmp.eq.s32.totalorder %s10, 1
      %p39 = por %p37, %p38
      %p40 = scmp.ne.s32.totalorder %s32, %s35
      %p41 = scmp.eq.s32.totalorder %s10, 0
      %p42 = por %p40, %p41
      %p43 = scmp.ne.s32.totalorder %s32, %s35
      %p44 = scmp.eq.s32.totalorder %s15, 1
      %p45 = por %p43, %p44
      %p46 = scmp.ne.s32.totalorder %s35, %s36
      %p47 = scmp.eq.s32.totalorder %s15, 0
      %p48 = por %p46, %p47
      %p49 = scmp.ne.s32.totalorder %s35, %s36
      %p50 = scmp.eq.s32.totalorder %s16, 1
      %p51 = por %p49, %p50
      %p53 = scmp.ne.s32.totalorder %s36, %s52
      %p54 = scmp.eq.s32.totalorder %s16, 0
      %p55 = por %p53, %p54
      %s56 = ssub.s32 %s18, %s25
      %p57 = scmp.eq.s32.totalorder %s56, 0
      %s59 = sadd.s32 %s58, 1
      %s60 = scalar_select %p57, %s58, %s59
      %p63 = pneg %p57
      %p64 = scmp.eq.s32.totalorder %s10, 1
      %p65 = por %p63, %p64
      %p66 = scmp.ne.s32.totalorder %s58, %s61
      %p67 = scmp.eq.s32.totalorder %s10, 0
      %p68 = por %p66, %p67
      %p69 = scmp.ne.s32.totalorder %s58, %s61
      %p70 = scmp.eq.s32.totalorder %s15, 1
      %p71 = por %p69, %p70
      %p72 = scmp.ne.s32.totalorder %s61, %s62
      %p73 = scmp.eq.s32.totalorder %s15, 0
      %p74 = por %p72, %p73
      %p75 = scmp.ne.s32.totalorder %s61, %s62
      %p76 = scmp.eq.s32.totalorder %s16, 1
      %p77 = por %p75, %p76
      %p79 = scmp.ne.s32.totalorder %s62, %s78
      %p80 = scmp.eq.s32.totalorder %s16, 0
      %p81 = por %p79, %p80
      %s82 = ssub.s32 %s17, %s29
      %p83 = scmp.eq.s32.totalorder %s82, 0
      %s85 = sadd.s32 %s84, 1
      %s86 = scalar_select %p83, %s84, %s85
      %p89 = pneg %p83
      %p90 = scmp.eq.s32.totalorder %s10, 1
      %p91 = por %p89, %p90
      %p92 = scmp.ne.s32.totalorder %s84, %s87
      %p93 = scmp.eq.s32.totalorder %s10, 0
      %p94 = por %p92, %p93
      %p95 = scmp.ne.s32.totalorder %s84, %s87
      %p96 = scmp.eq.s32.totalorder %s15, 1
      %p97 = por %p95, %p96
      %p98 = scmp.ne.s32.totalorder %s87, %s88
      %p99 = scmp.eq.s32.totalorder %s15, 0
      %p100 = por %p98, %p99
      %p101 = scmp.ne.s32.totalorder %s87, %s88
      %p102 = scmp.eq.s32.totalorder %s16, 1
      %p103 = por %p101, %p102
      %p105 = scmp.ne.s32.totalorder %s88, %s104
      %p106 = scmp.eq.s32.totalorder %s16, 0
      %p107 = por %p105, %p106
      %p108 = scmp.le.s32.totalorder 1, %s10
      %p109 = scmp.lt.s32.totalorder %s10, 3
      %p110 = pnand %p108, %p109
      %p111 = pneg %p110
      // Predicated region
      $region9: #{tpu_custom_call.1} parent=5 // pred_check
        _
      $region10: #{tpu_custom_call.1} parent=5 // pred_check_branch
        %113 = sbr.rel (%p110) target = $region12
      $region11: #{tpu_custom_call.1} parent=5 // pred_region
        %s114 = ssub.s32 %s10, 1
        // Predicated region
        $region13: #{tpu_custom_call.1} parent=11 // pred_check
          %p115 = pneg %p48
        $region14: #{tpu_custom_call.1} parent=11 // pred_check_branch
          %117 = sbr.rel (%p115) target = $region16
        $region15: #{tpu_custom_call.1} parent=11 // pred_region
          %s118 = smul.u32 2, %s20
          %s120 = ssub.s32 256, 256
          %121 = vsyncadd [#allocation4], %s120
          %s122 = smul.addr %s118, 128
          %s123 = scalar_lea.hbm %s0, %s122
          %s124 = sshll.u32 [#allocation3], 4
          %s125 = int_to_ptr.vmem [resolvable:$true] %s124
          %130 = dma.hbm_to_vmem [thread:$0]  %s123, 256, %s125, [#allocation4], 128, 128, 8
        $region16: #{tpu_custom_call.1} parent=11 // pred_fallthru
          _
        // Predicated region
        $region17: #{tpu_custom_call.1} parent=11 // pred_check
          %p131 = pneg %p74
        $region18: #{tpu_custom_call.1} parent=11 // pred_check_branch
          %133 = sbr.rel (%p131) target = $region20
        $region19: #{tpu_custom_call.1} parent=11 // pred_region
          %s134 = smul.u32 2, %s20
          %s136 = ssub.s32 256, 256
          %137 = vsyncadd [#allocation6], %s136
          %s138 = smul.addr %s134, 128
          %s139 = scalar_lea.hbm %s1, %s138
          %s140 = sshll.u32 [#allocation5], 4
          %s141 = int_to_ptr.vmem [resolvable:$true] %s140
          %146 = dma.hbm_to_vmem [thread:$0]  %s139, 256, %s141, [#allocation6], 128, 128, 8
        $region20: #{tpu_custom_call.1} parent=11 // pred_fallthru
          _
      $region12: #{tpu_custom_call.1} parent=5 // pred_fallthru
        _
      %p147 = scmp.lt.s32.totalorder %s10, 2
      // Predicated region
      $region21: #{tpu_custom_call.1} parent=5 // pred_check
        %p148 = pneg %p147
      $region22: #{tpu_custom_call.1} parent=5 // pred_check_branch
        %150 = sbr.rel (%p148) target = $region24
      $region23: #{tpu_custom_call.1} parent=5 // pred_region
        _
      $region24: #{tpu_custom_call.1} parent=5 // pred_fallthru
        _
      %p151 = scmp.le.s32.totalorder 1, %s10
      %p152 = scmp.lt.s32.totalorder %s10, 3
      %p153 = pnand %p151, %p152
      %p154 = pneg %p153
      // Predicated region
      $region25: #{tpu_custom_call.1} parent=5 // pred_check
        _
      $region26: #{tpu_custom_call.1} parent=5 // pred_check_branch
        %156 = sbr.rel (%p153) target = $region28
      $region27: #{tpu_custom_call.1} parent=5 // pred_region
        %s157 = ssub.s32 %s10, 1
        // Predicated region
        $region29: #{tpu_custom_call.1} parent=27 // pred_check
          %p158 = pneg %p48
        $region30: #{tpu_custom_call.1} parent=27 // pred_check_branch
          %160 = sbr.rel (%p158) target = $region32
        $region31: #{tpu_custom_call.1} parent=27 // pred_region
          %161 = dma.done [#allocation4], 256
        $region32: #{tpu_custom_call.1} parent=27 // pred_fallthru
          _
        // Predicated region
        $region33: #{tpu_custom_call.1} parent=27 // pred_check
          %p162 = pneg %p74
        $region34: #{tpu_custom_call.1} parent=27 // pred_check_branch
          %164 = sbr.rel (%p162) target = $region36
        $region35: #{tpu_custom_call.1} parent=27 // pred_region
          %165 = dma.done [#allocation6], 256
        $region36: #{tpu_custom_call.1} parent=27 // pred_fallthru
          _
        %p166 = pneg %p48
        %p167 = pneg %p45
        %p168 = pneg %p74
        %p169 = pneg %p71
        %p170 = pneg %p100
        %p171 = pneg %p97
        %p172 = scmp.lt.s32.totalorder %s19, 1
        %s173 = scalar_select %p172, %s19, 1
        %s174 = scalar_lea.vmem %s2, %s173
        %s175 = smul.u32 2, %s20
        %s176 = smul.u32 2, %s20
        %p177 = scmp.lt.s32.totalorder %s19, 1
        %s178 = scalar_select %p177, %s19, 1
        %s179 = scalar_lea.vmem %s2, %s178
        %p180 = scmp.eq.s32.totalorder %s20, 0
        // Predicated region
        $region37: #{tpu_custom_call.1} parent=27 // pred_check
          %p181 = pneg %p180
        $region38: #{tpu_custom_call.1} parent=27 // pred_check_branch
          %183 = sbr.rel (%p181) target = $region40
        $region39: #{tpu_custom_call.1} parent=27 // pred_region
          %184 = vst [vmem:[#allocation2] sm:$0xff] 0.0
        $region40: #{tpu_custom_call.1} parent=27 // pred_fallthru
          _
        %p185 = scmp.ge.s32.totalorder %s20, %s19
        // Predicated region
        $region41: #{tpu_custom_call.1} parent=27 // pred_check
          %p186 = pneg %p185
        $region42: #{tpu_custom_call.1} parent=27 // pred_check_branch
          %188 = sbr.rel (%p186) target = $region44
        $region43: #{tpu_custom_call.1} parent=27 // pred_region
          %v189 = vld [vmem:[#allocation3] sm:$0xff]
          %v190 = vld [vmem:[#allocation3 + $0x8] sm:$0xff]
          %v191 = vld [vmem:[#allocation5] sm:$0xff]
          %v192 = vld [vmem:[#allocation5 + $0x8] sm:$0xff]
          %v193 = vadd.f32 %v189, 1.1920929e-07
          %v194 = vadd.f32 %v190, 1.1920929e-07
          %v195 = vlog2.pop %v193
          %v196 = vmul.f32 %v195, 0.6931472
          %v197 = vlog2.pop %v194
          %v198 = vmul.f32 %v197, 0.6931472
          %v199 = vadd.f32 %v191, 1.1920929e-07
          %v200 = vadd.f32 %v192, 1.1920929e-07
          %v201 = vlog2.pop %v199
          %v202 = vmul.f32 %v201, 0.6931472
          %v203 = vlog2.pop %v200
          %v204 = vmul.f32 %v203, 0.6931472
          %v205 = vsub.f32 %v196, %v202
          %v206 = vsub.f32 %v198, %v204
          %v207 = vmul.f32 %v205, %v205
          %v208 = vmul.f32 %v206, %v206
          %v209 = vld [vmem:[#allocation2] sm:$0xff]
          %v210 = vadd.f32 %v207, %v208
          %v211 = vadd.f32 %v209, %v210
          %212 = vst [vmem:[#allocation2] sm:$0xff] %v211
        $region44: #{tpu_custom_call.1} parent=27 // pred_fallthru
          _
        // Predicated region
        $region45: #{tpu_custom_call.1} parent=27 // pred_check
          %p213 = pneg %p180
        $region46: #{tpu_custom_call.1} parent=27 // pred_check_branch
          %215 = sbr.rel (%p213) target = $region48
        $region47: #{tpu_custom_call.1} parent=27 // pred_region
          %v216 = vld [vmem:[#allocation2] sm:$0xff]
          %217 = vadd.xlane.f32.xlu0 %v216
          %v218 = vpop.xlane.xlu0 %217
          %v219 = vrot.slane %v218, 4
          %v220 = vadd.f32 %v218, %v219
          %v221 = vrot.slane %v220, 2
          %v222 = vadd.f32 %v220, %v221
          %v223 = vrot.slane %v222, 1
          %v224 = vadd.f32 %v222, %v223
          %s225 = vtos %v224
          %v226 = vstv %s225
          %vm227 = vcmask 0
          %228 = vst.msk [vmem:[%s179] sm:$0x1] %vm227, %v226
        $region48: #{tpu_custom_call.1} parent=27 // pred_fallthru
          _
        %p229 = scmp.lt.s32.totalorder %s19, 1
        %s230 = scalar_select %p229, %s19, 1
        %s231 = scalar_lea.vmem %s2, %s230
        // Predicated region
        $region49: #{tpu_custom_call.1} parent=27 // pred_check
          %p232 = pneg %p97
        $region50: #{tpu_custom_call.1} parent=27 // pred_check_branch
          %234 = sbr.rel (%p232) target = $region52
        $region51: #{tpu_custom_call.1} parent=27 // pred_region
          _
        $region52: #{tpu_custom_call.1} parent=27 // pred_fallthru
          _
      $region28: #{tpu_custom_call.1} parent=5 // pred_fallthru
        _
      %p235 = scmp.le.s32.totalorder 2, %s10
      // Predicated region
      $region53: #{tpu_custom_call.1} parent=5 // pred_check
        %p236 = pneg %p235
      $region54: #{tpu_custom_call.1} parent=5 // pred_check_branch
        %238 = sbr.rel (%p236) target = $region56
      $region55: #{tpu_custom_call.1} parent=5 // pred_region
        %s239 = ssub.s32 %s10, 2
        // Predicated region
        $region57: #{tpu_custom_call.1} parent=55 // pred_check
          %p240 = pneg %p103
        $region58: #{tpu_custom_call.1} parent=55 // pred_check_branch
          %242 = sbr.rel (%p240) target = $region60
        $region59: #{tpu_custom_call.1} parent=55 // pred_region
          %p243 = scmp.lt.s32.totalorder %s21, 1
          %s244 = scalar_select %p243, %s21, 1
          %s245 = scalar_lea.vmem %s2, %s244
        $region60: #{tpu_custom_call.1} parent=55 // pred_fallthru
          _
      $region56: #{tpu_custom_call.1} parent=5 // pred_fallthru
        _
    $region6: #{tpu_custom_call.1} parent=1 // loop_footer
      %s14 = sadd.s32 1, %s10
    $region7: #{tpu_custom_call.1} parent=1 // loop_footer_branch
      %9 = sbr.rel target = $region3
    $region8: #{tpu_custom_call.1} parent=1 // loop_exit
      _
    %246 = vsyncpa [#allocation4], 1
    %s247 = scalar_lea.sflag [#allocation4], 1
    %248 = vsyncpa %s247, 1
    %249 = vsyncpa [#allocation6], 1

</llo_original>
